<compile_context>
chip_gen: v5e
topology: v5e:2x2
jax: 0.10.0
libtpu: 0.0.40
codegen_flags: <defaults>
</compile_context>

<pallas_src>
import jax
import jax.numpy as jnp
from jax.experimental import pallas as pl
from jax.experimental.pallas import tpu as pltpu


# ----------------------------------------------------------------------------
# Primary path: GeneralModel.get_embed is a pure pass-through -> direct return.
# ----------------------------------------------------------------------------
def general_model_get_embed(text_feat: jax.Array, cellid: jax.Array):
    """Exact equivalent of GeneralModel.get_embed: returns (text_feat, cellid).

    No kernel is launched: a pass-through moves zero bytes.
    """
    return (text_feat, cellid)


# ----------------------------------------------------------------------------
# "Distinct graph node, same storage": donated identity (outputs alias inputs).
# ----------------------------------------------------------------------------
_get_embed_donated = jax.jit(
    lambda text_feat, cellid: (text_feat, cellid), donate_argnums=(0, 1)
)


def general_model_get_embed_aliased(text_feat: jax.Array, cellid: jax.Array):
    """get_embed as a distinct node whose outputs alias (donate) the inputs.

    Zero HBM traffic, zero VMEM staging — beats any copy kernel whenever the
    surrounding graph only needs a distinct node, not distinct storage.
    NOTE: the passed-in arrays are donated (consumed).
    """
    return _get_embed_donated(text_feat, cellid)


# ----------------------------------------------------------------------------
# "Genuinely fresh buffers": single HBM->HBM DMA per array (no VMEM staging).
# ----------------------------------------------------------------------------
def _hbm_copy_kernel(text_in, cell_in, text_out, cell_out, sems):
    # Both operands stay in HBM (memory_space=pl.ANY); issue both DMAs, then
    # wait.  No VMEM round trip, no (8,128) block constraint, no tiling needed.
    t_cp = pltpu.make_async_copy(text_in, text_out, sems.at[0])
    c_cp = pltpu.make_async_copy(cell_in, cell_out, sems.at[1])
    t_cp.start()
    c_cp.start()
    t_cp.wait()
    c_cp.wait()


def general_model_get_embed_materialized(text_feat: jax.Array, cellid: jax.Array):
    """get_embed with explicitly materialized (fresh) output buffers.

    One kernel invocation, no grid, inputs/outputs left in HBM, one direct
    HBM->HBM async copy per array at full HBM bandwidth.
    """
    text_bytes = text_feat.size * text_feat.dtype.itemsize
    cell_bytes = cellid.size * cellid.dtype.itemsize

    hbm_spec = pl.BlockSpec(memory_space=pl.ANY)

    t_out, c_out = pl.pallas_call(
        _hbm_copy_kernel,
        out_shape=(
            jax.ShapeDtypeStruct(text_feat.shape, text_feat.dtype),
            jax.ShapeDtypeStruct(cellid.shape, cellid.dtype),
        ),
        in_specs=[hbm_spec, hbm_spec],
        out_specs=(hbm_spec, hbm_spec),
        scratch_shapes=[pltpu.SemaphoreType.DMA((2,))],
        cost_estimate=pl.CostEstimate(
            flops=0,
            transcendentals=0,
            bytes_accessed=2 * (text_bytes + cell_bytes),
        ),
    )(text_feat, cellid)

    return t_out, c_out


# ----------------------------------------------------------------------------
# Abstract methods of the base class — no compute to lower.
# ----------------------------------------------------------------------------
def general_model_forward(*args, **kwargs):
    # TODO(synk): GeneralModel.forward() calls sys.exit("Implement compute_loss
    # function in model") — abstract, nothing to lower.
    raise NotImplementedError("Implement compute_loss function in model")


def general_model_predict(*args, **kwargs):
    # TODO(synk): GeneralModel.predict() calls sys.exit("Implement prediction
    # function in model") — abstract, nothing to lower.
    raise NotImplementedError("Implement prediction function in model")


if __name__ == "__main__":
    key = jax.random.PRNGKey(0)
    k_text, k_cell = jax.random.split(key)

    # Small shapes consistent with a text model: batch=2, seq=8, hidden=32.
    B, S, H, C = 2, 8, 32, 128
    text_feat = jax.random.normal(k_text, (B, S, H), dtype=jnp.float32)
    cellid = jax.random.randint(k_cell, (B, C), 0, 1000, dtype=jnp.int32)

    # 1) Primary pass-through path (no kernel, zero data movement).
    out_text, out_cell = general_model_get_embed(text_feat, cellid)
    jax.block_until_ready((out_text, out_cell))
    assert out_text.shape == text_feat.shape and out_text.dtype == text_feat.dtype
    assert out_cell.shape == cellid.shape and out_cell.dtype == cellid.dtype
    assert bool(jnp.all(out_text == text_feat))
    assert bool(jnp.all(out_cell == cellid))

    # 2) Materialized-copy path: fresh buffers via direct HBM->HBM DMA kernel.
    m_text, m_cell = general_model_get_embed_materialized(text_feat, cellid)
    jax.block_until_ready((m_text, m_cell))
    assert m_text.shape == text_feat.shape and m_text.dtype == text_feat.dtype
    assert m_cell.shape == cellid.shape and m_cell.dtype == cellid.dtype
    assert bool(jnp.all(m_text == text_feat))
    assert bool(jnp.all(m_cell == cellid))

    # 3) Aliased "copy node" via donation (distinct node, same storage).
    #    Use fresh device copies since the arguments are donated/consumed.
    t_donor = jnp.copy(text_feat)
    c_donor = jnp.copy(cellid)
    a_text, a_cell = general_model_get_embed_aliased(t_donor, c_donor)
    jax.block_until_ready((a_text, a_cell))
    assert a_text.shape == text_feat.shape and a_text.dtype == text_feat.dtype
    assert a_cell.shape == cellid.shape and a_cell.dtype == cellid.dtype
    assert bool(jnp.all(a_text == text_feat))
    assert bool(jnp.all(a_cell == cellid))

    print("KERNEL_OK")
</pallas_src>

<mosaic_0001>
module attributes {stable_mosaic.version = 11 : i64} {
  func.func @_hbm_copy_kernel(%arg0: memref<2x8x32xf32, #tpu.memory_space<any>>, %arg1: memref<2x128xi32, #tpu.memory_space<any>>, %arg2: memref<2x8x32xf32, #tpu.memory_space<any>>, %arg3: memref<2x128xi32, #tpu.memory_space<any>>, %arg4: memref<2x!tpu.dma_semaphore, #tpu.memory_space<semaphore_mem>>) attributes {dimension_semantics = [], scalar_prefetch = 0 : i64, scratch_operands = 1 : i64, tpu.core_type = #tpu.core_type<tc>} {
    %c0_i32 = arith.constant 0 : i32
    %0 = tpu.memref_slice %arg4[%c0_i32] : memref<2x!tpu.dma_semaphore, #tpu.memory_space<semaphore_mem>> -> memref<1x!tpu.dma_semaphore, #tpu.memory_space<semaphore_mem>>
    %1 = tpu.memref_squeeze %0 : memref<1x!tpu.dma_semaphore, #tpu.memory_space<semaphore_mem>> -> memref<!tpu.dma_semaphore, #tpu.memory_space<semaphore_mem>>
    tpu.enqueue_dma source(%arg0 : memref<2x8x32xf32, #tpu.memory_space<any>>) target(%arg2 : memref<2x8x32xf32, #tpu.memory_space<any>>) target_semaphore(%1 : memref<!tpu.dma_semaphore, #tpu.memory_space<semaphore_mem>>)
    %c1_i32 = arith.constant 1 : i32
    %2 = tpu.memref_slice %arg4[%c1_i32] : memref<2x!tpu.dma_semaphore, #tpu.memory_space<semaphore_mem>> -> memref<1x!tpu.dma_semaphore, #tpu.memory_space<semaphore_mem>>
    %3 = tpu.memref_squeeze %2 : memref<1x!tpu.dma_semaphore, #tpu.memory_space<semaphore_mem>> -> memref<!tpu.dma_semaphore, #tpu.memory_space<semaphore_mem>>
    tpu.enqueue_dma source(%arg1 : memref<2x128xi32, #tpu.memory_space<any>>) target(%arg3 : memref<2x128xi32, #tpu.memory_space<any>>) target_semaphore(%3 : memref<!tpu.dma_semaphore, #tpu.memory_space<semaphore_mem>>)
    %c0_i32_0 = arith.constant 0 : i32
    %4 = tpu.memref_slice %arg4[%c0_i32_0] : memref<2x!tpu.dma_semaphore, #tpu.memory_space<semaphore_mem>> -> memref<1x!tpu.dma_semaphore, #tpu.memory_space<semaphore_mem>>
    %5 = tpu.memref_squeeze %4 : memref<1x!tpu.dma_semaphore, #tpu.memory_space<semaphore_mem>> -> memref<!tpu.dma_semaphore, #tpu.memory_space<semaphore_mem>>
    tpu.wait_dma2 semaphore(%5 : memref<!tpu.dma_semaphore, #tpu.memory_space<semaphore_mem>>) src(%arg0 : memref<2x8x32xf32, #tpu.memory_space<any>>) dst(%arg2 : memref<2x8x32xf32, #tpu.memory_space<any>>)
    %c1_i32_1 = arith.constant 1 : i32
    %6 = tpu.memref_slice %arg4[%c1_i32_1] : memref<2x!tpu.dma_semaphore, #tpu.memory_space<semaphore_mem>> -> memref<1x!tpu.dma_semaphore, #tpu.memory_space<semaphore_mem>>
    %7 = tpu.memref_squeeze %6 : memref<1x!tpu.dma_semaphore, #tpu.memory_space<semaphore_mem>> -> memref<!tpu.dma_semaphore, #tpu.memory_space<semaphore_mem>>
    tpu.wait_dma2 semaphore(%7 : memref<!tpu.dma_semaphore, #tpu.memory_space<semaphore_mem>>) src(%arg1 : memref<2x128xi32, #tpu.memory_space<any>>) dst(%arg3 : memref<2x128xi32, #tpu.memory_space<any>>)
    return
  }
}

</mosaic_0001>

<llo_original>
// kernel: tpu_custom_call.1
$region0: #{tpu_custom_call.1}
  #allocation0 [shape = 'u32[]', space=smem, size = 0x4, offset = 0x4, fixed_abs, tag = 'smem constant byte address 0x4 - core index']
  #allocation1 [shape = 'u32[72,128]{1,0:T(1,128)}', space=vmem, size = 0x9000, scoped, tag = 'internal scratch']
  #allocation2 [shape = 's32[2]{0}', space=sflag, size = 0x8, scoped, tag = 'scratch operand']
  #allocation3 [shape = 's32[]', space=sflag, size = 0x4, offset = 0, fixed_abs, tag = 'sflag constant byte address 0x0 - dummy sync flag']
  #allocation4 [shape = 'u32[0]{0}', space=smem, size = 0, offset = 0, fixed_abs, tag = 'smem constant byte address 0x0 - null']
  #allocation5 [shape = 's32[]', space=sflag, size = 0x4, offset = 0, fixed_abs, tag = 'sflag constant byte address 0x0 - dummy sync flag']
  #allocation6 [shape = 'u32[0]{0}', space=smem, size = 0, offset = 0, fixed_abs, tag = 'smem constant byte address 0x0 - null']
  %s0 = inlined_call_operand.hbm [shape: f32[2,8,32], index: 0, kind: input, shape index: {}]
  %s1 = inlined_call_operand.hbm [shape: s32[2,128], index: 1, kind: input, shape index: {}]
  %s2 = inlined_call_operand.hbm [shape: f32[2,8,32], index: 2, kind: output, shape index: {0}]
  %s3 = inlined_call_operand.hbm [shape: s32[2,128], index: 3, kind: output, shape index: {1}]
  %4 = xla_tuple %s2, %s3
  %s5 = sld [smem:[#allocation0]]
  $region2: #{tpu_custom_call.1} parent=0
    _
  %s7 = ssub.s32 1, %s5
  %s8 = scalar_select 0, %s7, %s5
  %s10 = sshll.u32 1, 14
  %s11 = sxor.u32 4294967295, %s10
  %s13 = sshll.u32 %s0, 4
  %s14 = int_to_ptr.hbm [resolvable:$true] %s13
  %s15 = sshll.u32 %s2, 4
  %s16 = int_to_ptr.hbm [resolvable:$true] %s15
  %19 = dma.general %s14, 256, %s16, [#allocation2], [#allocation3], [#allocation4], 0, 0
  %s20 = scalar_lea.sflag [#allocation2], 1
  %s22 = sshll.u32 1, 14
  %s23 = sxor.u32 4294967295, %s22
  %s25 = sshll.u32 %s1, 4
  %s26 = int_to_ptr.hbm [resolvable:$true] %s25
  %s27 = sshll.u32 %s3, 4
  %s28 = int_to_ptr.hbm [resolvable:$true] %s27
  %31 = dma.general %s26, 32, %s28, %s20, [#allocation5], [#allocation6], 0, 0
  %s32 = smul.u32 2, 8
  %s33 = smul.u32 %s32, 1
  %s34 = sshll.u32 %s33, 4
  %35 = dma.done [#allocation2], %s34
  %s36 = smul.u32 2, 1
  %s37 = sshll.u32 %s36, 4
  %38 = dma.done %s20, %s37
  %39 = vsyncmov [#allocation2]
  %s40 = vpop.sfrf %39
  %p41 = scmp.eq.s32.totalorder %s40, 0
  %p42 = pneg %p41
  %44 = shalt.err (%p42)
  %s45 = scalar_lea.sflag [#allocation2], 1
  %46 = vsyncmov %s45
  %s47 = vpop.sfrf %46
  %p48 = scmp.eq.s32.totalorder %s47, 0
  %p49 = pneg %p48
  %51 = shalt.err (%p49)

</llo_original>
